<compile_context>
chip_gen: v7x
topology: tpu7x:2x2x1
jax: 0.10.0
libtpu: 0.0.40
codegen_flags: <defaults>
</compile_context>

<pallas_src>
import functools

import jax
import jax.numpy as jnp
from jax.experimental import pallas as pl
from jax.experimental.pallas import tpu as pltpu

HIDDEN = 81
HIDDEN_PAD = 128   # lane-dense hidden width (81 -> 128)
BN_EPS = 1e-5


def _round_up(n, m):
    return ((n + m - 1) // m) * m


def _mlp_bn_kernel(x_ref, p_ref, o_ref, *, inp, out_dim, w2_row, slab_row, inv_b):
    """Fused Linear -> BatchNorm1d(train) -> Tanh -> Linear -> Tanh.

    p_ref is one packed (rows, 128) f32 slab:
      rows [0, inp)                : W1   (inp, 128), cols >= 81 zero
      rows [w2_row, w2_row+128)    : W2   (128, 128), rows >= 81 / cols >= out zero
      row  slab_row                : gamma (padded lanes zero)
      row  slab_row + 1            : beta  (padded lanes zero)
      row  slab_row + 2            : b2    (padded lanes zero)
    """
    # Static slices of the single parameter slab (views; no extra DMA).
    w1 = p_ref[0:inp, :]                                   # (inp, 128)
    w2 = p_ref[w2_row:w2_row + HIDDEN_PAD, :]              # (128, 128)
    gamma = p_ref[slab_row:slab_row + 1, :]                # (1, 128)
    beta = p_ref[slab_row + 1:slab_row + 2, :]             # (1, 128)
    b2 = p_ref[slab_row + 2:slab_row + 3, :]               # (1, 128)

    x = x_ref[...]                                         # (B, inp)

    # ---- Linear(inp, 81); b1 omitted (cancelled exactly by batch-mean) ----
    h = jnp.dot(x, w1, preferred_element_type=jnp.float32)          # (B, 128)

    # ---- BatchNorm1d(81), training mode: batch mean, biased batch variance ----
    # Axis-0 reductions on the idle MXU (ones-row matmuls); two-pass variance.
    ones_row = jnp.ones((1, x.shape[0]), jnp.float32)
    mean = jnp.dot(ones_row, h, preferred_element_type=jnp.float32) * inv_b   # (1, 128)
    centered = h - mean
    var = jnp.dot(ones_row, centered * centered,
                  preferred_element_type=jnp.float32) * inv_b                 # (1, 128)
    scale = gamma * jax.lax.rsqrt(var + BN_EPS)            # gamma folded into scale
    hact = jnp.tanh(centered * scale + beta)               # padded lanes stay exactly 0

    # ---- Linear(81, out) + Tanh; store the real-width (B, out) result ----
    y = jnp.dot(hact, w2, preferred_element_type=jnp.float32)       # (B, 128)
    o_ref[...] = jnp.tanh(y[:, :out_dim] + b2[:, :out_dim])         # (B, out)


def pack_params(w1, gamma, beta, w2, b2):
    """Pad & pack all parameters into ONE (rows, 128) f32 slab (single DMA).

    Inputs are in x @ W layout: w1 (inp, 81), gamma/beta (81,) or (1, 81),
    w2 (81, out), b2 (out,) or (1, out).  b1 is intentionally not packed: it is
    algebraically cancelled by the training-mode batch-mean subtraction.
    Returns (packed, meta) where meta holds the static row offsets / dims.
    """
    inp, hidden = w1.shape
    out = w2.shape[1]
    assert hidden == HIDDEN and hidden <= HIDDEN_PAD and out <= HIDDEN_PAD

    w1_rows = _round_up(inp, 8)
    w2_row = w1_rows
    slab_row = w2_row + HIDDEN_PAD
    total_rows = _round_up(slab_row + 3, 8)

    p = jnp.zeros((total_rows, HIDDEN_PAD), jnp.float32)
    p = p.at[:inp, :hidden].set(w1)
    p = p.at[w2_row:w2_row + hidden, :out].set(w2)
    p = p.at[slab_row, :hidden].set(jnp.ravel(gamma))
    p = p.at[slab_row + 1, :hidden].set(jnp.ravel(beta))
    p = p.at[slab_row + 2, :out].set(jnp.ravel(b2))

    meta = {"inp": inp, "out_dim": out, "w2_row": w2_row, "slab_row": slab_row}
    return p, meta


def make_forward(meta):
    """Build a jitted forward: (x (B,inp) f32, packed params) -> (B, out) f32."""
    inp = meta["inp"]
    out_dim = meta["out_dim"]
    w2_row = meta["w2_row"]
    slab_row = meta["slab_row"]

    @jax.jit
    def fwd(x, packed):
        B = x.shape[0]
        assert B > 1, "BatchNorm1d in training mode requires batch size > 1"
        assert x.shape[1] == inp

        kernel = functools.partial(
            _mlp_bn_kernel, inp=inp, out_dim=out_dim,
            w2_row=w2_row, slab_row=slab_row, inv_b=1.0 / B)

        vmem = pl.BlockSpec(memory_space=pltpu.MemorySpace.VMEM)
        cost = pl.CostEstimate(
            flops=2 * B * HIDDEN_PAD * (inp + HIDDEN_PAD) + 4 * B * HIDDEN_PAD,
            transcendentals=B * (HIDDEN_PAD + out_dim) + HIDDEN_PAD,
            bytes_accessed=4 * (x.size + packed.size + B * out_dim),
        )
        return pl.pallas_call(
            kernel,
            out_shape=jax.ShapeDtypeStruct((B, out_dim), jnp.float32),
            in_specs=[vmem, vmem],
            out_specs=vmem,
            cost_estimate=cost,
        )(x, packed)

    return fwd


def init_params(key, inp=27, hidden=HIDDEN, out=2):
    """Deterministic init mimicking nn.Linear default U(-1/sqrt(fan_in), ...)."""
    k1, k2, k3, k4 = jax.random.split(key, 4)
    bound1 = 1.0 / (inp ** 0.5)
    bound2 = 1.0 / (hidden ** 0.5)
    # Stored in x @ W layout: (in, out)
    w1 = jax.random.uniform(k1, (inp, hidden), jnp.float32, -bound1, bound1)
    b1 = jax.random.uniform(k2, (1, hidden), jnp.float32, -bound1, bound1)
    w2 = jax.random.uniform(k3, (hidden, out), jnp.float32, -bound2, bound2)
    b2 = jax.random.uniform(k4, (1, out), jnp.float32, -bound2, bound2)
    # BatchNorm1d affine params at init: gamma=1, beta=0
    gamma = jnp.ones((1, hidden), jnp.float32)
    beta = jnp.zeros((1, hidden), jnp.float32)
    return w1, b1, gamma, beta, w2, b2


if __name__ == "__main__":
    key = jax.random.PRNGKey(0)
    kx, kp = jax.random.split(key)

    B, INP, OUT = 64, 27, 2
    x = jax.random.normal(kx, (B, INP), jnp.float32)
    w1, b1, gamma, beta, w2, b2 = init_params(kp, INP, HIDDEN, OUT)

    # Pack / pad everything into one parameter slab, once.
    packed, meta = pack_params(w1, gamma, beta, w2, b2)
    fwd = make_forward(meta)

    y = jax.block_until_ready(fwd(x, packed))

    # Pure-JAX reference with full PyTorch training-mode semantics (INCLUDING b1,
    # which the kernel drops because the batch mean cancels it exactly).
    h = x @ w1 + b1
    m = h.mean(axis=0, keepdims=True)
    v = ((h - m) ** 2).mean(axis=0, keepdims=True)
    h = jnp.tanh((h - m) * jax.lax.rsqrt(v + BN_EPS) * gamma + beta)
    y_ref = jnp.tanh(h @ w2 + b2)

    assert y.shape == (B, OUT)
    assert jnp.allclose(y, y_ref, atol=3e-5, rtol=1e-5), "mismatch vs reference"

    print("KERNEL_OK")
</pallas_src>

<mosaic_0001>
module attributes {stable_mosaic.version = 11 : i64} {
  func.func @_mlp_bn_kernel(%arg0: memref<64x27xf32, #tpu.memory_space<vmem>>, %arg1: memref<168x128xf32, #tpu.memory_space<vmem>>, %arg2: memref<64x2xf32, #tpu.memory_space<vmem>>) attributes {dimension_semantics = [], scalar_prefetch = 0 : i64, scratch_operands = 0 : i64, tpu.core_type = #tpu.core_type<tc>} {
    %c0 = arith.constant 0 : index
    %c0_0 = arith.constant 0 : index
    %0 = vector.load %arg1[%c0, %c0_0] : memref<168x128xf32, #tpu.memory_space<vmem>>, vector<27x128xf32>
    %c32 = arith.constant 32 : index
    %c0_1 = arith.constant 0 : index
    %1 = vector.load %arg1[%c32, %c0_1] : memref<168x128xf32, #tpu.memory_space<vmem>>, vector<128x128xf32>
    %c160 = arith.constant 160 : index
    %c0_2 = arith.constant 0 : index
    %2 = vector.load %arg1[%c160, %c0_2] : memref<168x128xf32, #tpu.memory_space<vmem>>, vector<1x128xf32>
    %c161 = arith.constant 161 : index
    %c0_3 = arith.constant 0 : index
    %3 = vector.load %arg1[%c161, %c0_3] : memref<168x128xf32, #tpu.memory_space<vmem>>, vector<1x128xf32>
    %c162 = arith.constant 162 : index
    %c0_4 = arith.constant 0 : index
    %4 = vector.load %arg1[%c162, %c0_4] : memref<168x128xf32, #tpu.memory_space<vmem>>, vector<1x128xf32>
    %c0_5 = arith.constant 0 : index
    %c0_6 = arith.constant 0 : index
    %5 = vector.load %arg0[%c0_5, %c0_6] : memref<64x27xf32, #tpu.memory_space<vmem>>, vector<64x27xf32>
    %cst = arith.constant dense<0.000000e+00> : vector<64x128xf32>
    %6 = tpu.matmul %5, %0, %cst {dimension_numbers = #tpu.dot_dimension_numbers<[1], [0], [0], [1], [0, 0, 1, 1], [], []>} : vector<64x27xf32>, vector<27x128xf32>, vector<64x128xf32> -> vector<64x128xf32>
    %cst_7 = arith.constant 1.000000e+00 : f32
    %7 = vector.broadcast %cst_7 : f32 to vector<1x64xf32>
    %cst_8 = arith.constant dense<0.000000e+00> : vector<1x128xf32>
    %8 = tpu.matmul %7, %6, %cst_8 {dimension_numbers = #tpu.dot_dimension_numbers<[1], [0], [0], [1], [0, 0, 1, 1], [], []>} : vector<1x64xf32>, vector<64x128xf32>, vector<1x128xf32> -> vector<1x128xf32>
    %cst_9 = arith.constant 1.562500e-02 : f32
    %9 = vector.broadcast %cst_9 : f32 to vector<1x128xf32>
    %10 = arith.mulf %8, %9 : vector<1x128xf32>
    %11 = vector.broadcast %10 : vector<1x128xf32> to vector<64x128xf32>
    %12 = arith.subf %6, %11 : vector<64x128xf32>
    %13 = arith.mulf %12, %12 : vector<64x128xf32>
    %cst_10 = arith.constant dense<0.000000e+00> : vector<1x128xf32>
    %14 = tpu.matmul %7, %13, %cst_10 {dimension_numbers = #tpu.dot_dimension_numbers<[1], [0], [0], [1], [0, 0, 1, 1], [], []>} : vector<1x64xf32>, vector<64x128xf32>, vector<1x128xf32> -> vector<1x128xf32>
    %cst_11 = arith.constant 1.562500e-02 : f32
    %15 = vector.broadcast %cst_11 : f32 to vector<1x128xf32>
    %16 = arith.mulf %14, %15 : vector<1x128xf32>
    %cst_12 = arith.constant 9.99999974E-6 : f32
    %17 = vector.broadcast %cst_12 : f32 to vector<1x128xf32>
    %18 = arith.addf %16, %17 : vector<1x128xf32>
    %19 = math.rsqrt %18 : vector<1x128xf32>
    %20 = arith.mulf %2, %19 : vector<1x128xf32>
    %21 = vector.broadcast %20 : vector<1x128xf32> to vector<64x128xf32>
    %22 = arith.mulf %12, %21 : vector<64x128xf32>
    %23 = vector.broadcast %3 : vector<1x128xf32> to vector<64x128xf32>
    %24 = arith.addf %22, %23 : vector<64x128xf32>
    %25 = math.tanh %24 : vector<64x128xf32>
    %cst_13 = arith.constant dense<0.000000e+00> : vector<64x128xf32>
    %26 = tpu.matmul %25, %1, %cst_13 {dimension_numbers = #tpu.dot_dimension_numbers<[1], [0], [0], [1], [0, 0, 1, 1], [], []>} : vector<64x128xf32>, vector<128x128xf32>, vector<64x128xf32> -> vector<64x128xf32>
    %27 = vector.extract_strided_slice %26 {offsets = [0, 0], sizes = [64, 2], strides = [1, 1]} : vector<64x128xf32> to vector<64x2xf32>
    %28 = vector.extract_strided_slice %4 {offsets = [0, 0], sizes = [1, 2], strides = [1, 1]} : vector<1x128xf32> to vector<1x2xf32>
    %29 = vector.broadcast %28 : vector<1x2xf32> to vector<64x2xf32>
    %30 = arith.addf %27, %29 : vector<64x2xf32>
    %31 = math.tanh %30 : vector<64x2xf32>
    %c0_14 = arith.constant 0 : index
    %c0_15 = arith.constant 0 : index
    %32 = vector.load %arg2[%c0_14, %c0_15] : memref<64x2xf32, #tpu.memory_space<vmem>>, vector<64x2xf32>
    tpu.vector_store %arg2[%c0_14, %c0_15], %31 {strides = array<i32>} : memref<64x2xf32, #tpu.memory_space<vmem>>, vector<64x2xf32>,
    return
  }
}

</mosaic_0001>

<llo_original>
// kernel: fwd.1
$region0: #{fwd.1}
  #allocation0 [shape = 'u32[]', space=smem, size = 0x4, offset = 0x4, fixed_abs, tag = 'smem constant byte address 0x4 - core index']
  #allocation1 [shape = 'u32[144,128]{1,0:T(1,128)}', space=vmem, size = 0x12000, scoped, tag = 'internal scratch']
  %s0 = inlined_call_operand.vmem [shape: f32[64,27], index: 0, kind: input, shape index: {}]
  %s1 = inlined_call_operand.hbm [shape: f32[168,128], index: 1, kind: input, shape index: {}]
  %s2 = inlined_call_operand.vmem [shape: f32[64,2], index: 2, kind: output, shape index: {}]
  %s3 = sld [smem:[#allocation0]]
  $region22: #{fwd.1} parent=0
    _
  %s5 = ssub.s32 1, %s3
  %s6 = scalar_select 0, %s5, %s3
  $region1: #{fwd.1} parent=0
    #allocation2 [shape = 'u8[86016]{0}', space=vmem, size = 0x15000, scoped, tag = 'input window, operand 1, single buffered']
    #allocation3 [shape = 's32[1]{0}', space=sflag, size = 0x4, scoped, tag = 'scoped memory for fwd.1']
    %7 = vsyncpa [#allocation3], 0
    // Predicated region
    $region2: #{fwd.1} parent=1 // pred_check
      _
    $region3: #{fwd.1} parent=1 // pred_check_branch
      %9 = sbr.rel (0) target = $region5
    $region4: #{fwd.1} parent=1 // pred_region
      _
    $region5: #{fwd.1} parent=1 // pred_fallthru
      _
    // Predicated region
    $region6: #{fwd.1} parent=1 // pred_check
      _
    $region7: #{fwd.1} parent=1 // pred_check_branch
      %11 = sbr.rel (0) target = $region9
    $region8: #{fwd.1} parent=1 // pred_region
      %s13 = ssub.s32 2688, 2688
      %14 = vsyncadd [#allocation3], %s13
      %s15 = sshll.u32 [#allocation2], 4
      %s16 = int_to_ptr.vmem [resolvable:$true] %s15
      %21 = dma.hbm_to_vmem [thread:$0]  %s1, 2688, %s16, [#allocation3], 128, 128, 8
    $region9: #{fwd.1} parent=1 // pred_fallthru
      _
    // Predicated region
    $region10: #{fwd.1} parent=1 // pred_check
      _
    $region11: #{fwd.1} parent=1 // pred_check_branch
      %23 = sbr.rel (0) target = $region13
    $region12: #{fwd.1} parent=1 // pred_region
      %24 = dma.done [#allocation3], 2688
    $region13: #{fwd.1} parent=1 // pred_fallthru
      _
    %v25 = vld [vmem:[#allocation2] sm:$0xff]
    %v26 = vld [vmem:[#allocation2 + $0x8] sm:$0xff]
    %v27 = vld [vmem:[#allocation2 + $0x10] sm:$0xff]
    %v28 = vld [vmem:[#allocation2 + $0x18] sm:$0x7]
    %v29 = vld [vmem:[#allocation2 + $0x20] sm:$0xff]
    %v30 = vld [vmem:[#allocation2 + $0x28] sm:$0xff]
    %v31 = vld [vmem:[#allocation2 + $0x30] sm:$0xff]
    %v32 = vld [vmem:[#allocation2 + $0x38] sm:$0xff]
    %v33 = vld [vmem:[#allocation2 + $0x40] sm:$0xff]
    %v34 = vld [vmem:[#allocation2 + $0x48] sm:$0xff]
    %v35 = vld [vmem:[#allocation2 + $0x50] sm:$0xff]
    %v36 = vld [vmem:[#allocation2 + $0x58] sm:$0xff]
    %v37 = vld [vmem:[#allocation2 + $0x60] sm:$0xff]
    %v38 = vld [vmem:[#allocation2 + $0x68] sm:$0xff]
    %v39 = vld [vmem:[#allocation2 + $0x70] sm:$0xff]
    %v40 = vld [vmem:[#allocation2 + $0x78] sm:$0xff]
    %v41 = vld [vmem:[#allocation2 + $0x80] sm:$0xff]
    %v42 = vld [vmem:[#allocation2 + $0x88] sm:$0xff]
    %v43 = vld [vmem:[#allocation2 + $0x90] sm:$0xff]
    %v44 = vld [vmem:[#allocation2 + $0x98] sm:$0xff]
    %v45 = vld [vmem:[#allocation2 + $0xa0] sm:$0x1]
    %v46 = vld [vmem:[#allocation2 + $0xa1] sm:$0x1]
    %v47 = vld [vmem:[#allocation2 + $0xa2] sm:$0x1]
    %v48 = vld [vmem:[%s0] sm:$0xff]
    %v49 = vld [vmem:[%s0 + $0x8] sm:$0xff]
    %v50 = vld [vmem:[%s0 + $0x10] sm:$0xff]
    %v51 = vld [vmem:[%s0 + $0x18] sm:$0xff]
    %v52 = vld [vmem:[%s0 + $0x20] sm:$0xff]
    %v53 = vld [vmem:[%s0 + $0x28] sm:$0xff]
    %v54 = vld [vmem:[%s0 + $0x30] sm:$0xff]
    %v55 = vld [vmem:[%s0 + $0x38] sm:$0xff]
    %vm56 = vcmask 220160
    %v58 = vsel %vm56, %v48, 0
    %v61 = vsel %vm56, %v49, 0
    %v64 = vsel %vm56, %v50, 0
    %v67 = vsel %vm56, %v51, 0
    %v70 = vsel %vm56, %v52, 0
    %v73 = vsel %vm56, %v53, 0
    %v76 = vsel %vm56, %v54, 0
    %v79 = vsel %vm56, %v55, 0
    %vm81 = vcmask 1042432
    %v83 = vsel %vm81, %v28, 0
    %85 = vmatprep.subr.mxu0 0.0
    %86 = vmatpush1.msra.mxu0 %v25
    %87 = vmatprep.subr.mxu0 0.0
    %88 = vmatpush1.msra.mxu0 %v26
    %89 = vmatprep.subr.mxu0 0.0
    %90 = vmatpush1.msra.mxu0 %v27
    %91 = vmatprep.subr.mxu0 0.0
    %92 = vmatpush1.msra.mxu0 %v83
    %93 = vmatprep.subr.mxu0 0.0
    %94 = vmatpush1.msra.mxu0 0.0
    %95 = vmatprep.subr.mxu0 0.0
    %96 = vmatpush1.msra.mxu0 0.0
    %97 = vmatprep.subr.mxu0 0.0
    %98 = vmatpush1.msra.mxu0 0.0
    %99 = vmatprep.subr.mxu0 0.0
    %100 = vmatpush1.msra.mxu0 0.0
    %101 = vmatprep.subr.mxu0 0.0
    %102 = vmatpush1.msra.mxu0 0.0
    %103 = vmatprep.subr.mxu0 0.0
    %104 = vmatpush1.msra.mxu0 0.0
    %105 = vmatprep.subr.mxu0 0.0
    %106 = vmatpush1.msra.mxu0 0.0
    %107 = vmatprep.subr.mxu0 0.0
    %108 = vmatpush1.msra.mxu0 0.0
    %109 = vmatprep.subr.mxu0 0.0
    %110 = vmatpush1.msra.mxu0 0.0
    %111 = vmatprep.subr.mxu0 0.0
    %112 = vmatpush1.msra.mxu0 0.0
    %113 = vmatprep.subr.mxu0 0.0
    %114 = vmatpush1.msra.mxu0 0.0
    %115 = vmatprep.subr.mxu0 0.0
    %116 = vmatpush1.msra.mxu0 0.0
    %117 = vmatprep.subr.mxu0 0.0
    %118 = vmatpush1.msra.mxu0 0.0
    %119 = vmatprep.subr.mxu0 0.0
    %120 = vmatpush1.msra.mxu0 0.0
    %121 = vmatprep.subr.mxu0 0.0
    %122 = vmatpush1.msra.mxu0 0.0
    %123 = vmatprep.subr.mxu0 0.0
    %124 = vmatpush1.msra.mxu0 0.0
    %125 = vmatprep.subr.mxu0 0.0
    %126 = vmatpush1.msra.mxu0 0.0
    %127 = vmatprep.subr.mxu0 0.0
    %128 = vmatpush1.msra.mxu0 0.0
    %129 = vmatprep.subr.mxu0 0.0
    %130 = vmatpush1.msra.mxu0 0.0
    %131 = vmatprep.subr.mxu0 0.0
    %132 = vmatpush1.msra.mxu0 0.0
    %133 = vmatprep.subr.mxu0 0.0
    %134 = vmatpush1.msra.mxu0 0.0
    %135 = vmatprep.subr.mxu0 0.0
    %136 = vmatpush1.msra.mxu0 0.0
    %137 = vmatprep.subr.mxu0 0.0
    %138 = vmatpush1.msra.mxu0 0.0
    %139 = vmatprep.subr.mxu0 0.0
    %140 = vmatpush1.msra.mxu0 0.0
    %141 = vmatprep.subr.mxu0 0.0
    %142 = vmatpush1.msra.mxu0 0.0
    %143 = vmatprep.subr.mxu0 0.0
    %144 = vmatpush1.msra.mxu0 0.0
    %145 = vmatprep.subr.mxu0 0.0
    %146 = vmatpush1.msra.mxu0 0.0
    %147 = vmatprep.subr.mxu0 0.0
    %148 = vmatpush1.msra.mxu0 0.0
    %149 = vmatprep.mubr.f32.mxu0 0.0
    %150 = vmatmul.mubr.f32.gmra.mrb[0].mxu0 %v58
    %v151 = vpop.f32.mrb[0].mxu0
    %v152 = vadd.f32 0.0, %v151
    %v153 = vpop.f32.mrb[0].mxu0
    %154 = vmatprep.mubr.f32.mxu0 0.0
    %155 = vmatmul.mubr.f32.gmra.mrb[0].mxu0 %v61
    %v156 = vpop.f32.mrb[0].mxu0
    %v157 = vadd.f32 0.0, %v156
    %v158 = vpop.f32.mrb[0].mxu0
    %159 = vmatprep.mubr.f32.mxu0 0.0
    %160 = vmatmul.mubr.f32.gmra.mrb[0].mxu0 %v64
    %v161 = vpop.f32.mrb[0].mxu0
    %v162 = vadd.f32 0.0, %v161
    %v163 = vpop.f32.mrb[0].mxu0
    %164 = vmatprep.mubr.f32.mxu0 0.0
    %165 = vmatmul.mubr.f32.gmra.mrb[0].mxu0 %v67
    %v166 = vpop.f32.mrb[0].mxu0
    %v167 = vadd.f32 0.0, %v166
    %v168 = vpop.f32.mrb[0].mxu0
    %169 = vmatprep.mubr.f32.mxu0 0.0
    %170 = vmatmul.mubr.f32.gmra.mrb[0].mxu0 %v70
    %v171 = vpop.f32.mrb[0].mxu0
    %v172 = vadd.f32 0.0, %v171
    %v173 = vpop.f32.mrb[0].mxu0
    %174 = vmatprep.mubr.f32.mxu0 0.0
    %175 = vmatmul.mubr.f32.gmra.mrb[0].mxu0 %v73
    %v176 = vpop.f32.mrb[0].mxu0
    %v177 = vadd.f32 0.0, %v176
    %v178 = vpop.f32.mrb[0].mxu0
    %179 = vmatprep.mubr.f32.mxu0 0.0
    %180 = vmatmul.mubr.f32.gmra.mrb[0].mxu0 %v76
    %v181 = vpop.f32.mrb[0].mxu0
    %v182 = vadd.f32 0.0, %v181
    %v183 = vpop.f32.mrb[0].mxu0
    %184 = vmatprep.mubr.f32.mxu0 0.0
    %185 = vmatmul.mubr.f32.gmra.mrb[0].mxu0 %v79
    %v186 = vpop.f32.mrb[0].mxu0
    %v187 = vadd.f32 0.0, %v186
    %v188 = vpop.f32.mrb[0].mxu0
    %189 = vdwg.mxu0
    %vm190 = vcmask 523264
    %v192 = vsel %vm190, 1.0, 0
    %194 = vmatprep.subr.mxu0 0.0
    %195 = vmatpush1.msra.mxu0 %v152
    %196 = vmatprep.subr.mxu0 0.0
    %197 = vmatpush1.msra.mxu0 %v157
    %198 = vmatprep.subr.mxu0 0.0
    %199 = vmatpush1.msra.mxu0 %v162
    %200 = vmatprep.subr.mxu0 0.0
    %201 = vmatpush1.msra.mxu0 %v167
    %202 = vmatprep.subr.mxu0 0.0
    %203 = vmatpush1.msra.mxu0 %v172
    %204 = vmatprep.subr.mxu0 0.0
    %205 = vmatpush1.msra.mxu0 %v177
    %206 = vmatprep.subr.mxu0 0.0
    %207 = vmatpush1.msra.mxu0 %v182
    %208 = vmatprep.subr.mxu0 0.0
    %209 = vmatpush1.msra.mxu0 %v187
    %210 = vmatprep.subr.mxu0 0.0
    %211 = vmatpush1.msra.mxu0 0.0
    %212 = vmatprep.subr.mxu0 0.0
    %213 = vmatpush1.msra.mxu0 0.0
    %214 = vmatprep.subr.mxu0 0.0
    %215 = vmatpush1.msra.mxu0 0.0
    %216 = vmatprep.subr.mxu0 0.0
    %217 = vmatpush1.msra.mxu0 0.0
    %218 = vmatprep.subr.mxu0 0.0
    %219 = vmatpush1.msra.mxu0 0.0
    %220 = vmatprep.subr.mxu0 0.0
    %221 = vmatpush1.msra.mxu0 0.0
    %222 = vmatprep.subr.mxu0 0.0
    %223 = vmatpush1.msra.mxu0 0.0
    %224 = vmatprep.subr.mxu0 0.0
    %225 = vmatpush1.msra.mxu0 0.0
    %226 = vmatprep.subr.mxu0 0.0
    %227 = vmatpush1.msra.mxu0 0.0
    %228 = vmatprep.subr.mxu0 0.0
    %229 = vmatpush1.msra.mxu0 0.0
    %230 = vmatprep.subr.mxu0 0.0
    %231 = vmatpush1.msra.mxu0 0.0
    %232 = vmatprep.subr.mxu0 0.0
    %233 = vmatpush1.msra.mxu0 0.0
    %234 = vmatprep.subr.mxu0 0.0
    %235 = vmatpush1.msra.mxu0 0.0
    %236 = vmatprep.subr.mxu0 0.0
    %237 = vmatpush1.msra.mxu0 0.0
    %238 = vmatprep.subr.mxu0 0.0
    %239 = vmatpush1.msra.mxu0 0.0
    %240 = vmatprep.subr.mxu0 0.0
    %241 = vmatpush1.msra.mxu0 0.0
    %242 = vmatprep.subr.mxu0 0.0
    %243 = vmatpush1.msra.mxu0 0.0
    %244 = vmatprep.subr.mxu0 0.0
    %245 = vmatpush1.msra.mxu0 0.0
    %246 = vmatprep.subr.mxu0 0.0
    %247 = vmatpush1.msra.mxu0 0.0
    %248 = vmatprep.subr.mxu0 0.0
    %249 = vmatpush1.msra.mxu0 0.0
    %250 = vmatprep.subr.mxu0 0.0
    %251 = vmatpush1.msra.mxu0 0.0
    %252 = vmatprep.subr.mxu0 0.0
    %253 = vmatpush1.msra.mxu0 0.0
    %254 = vmatprep.subr.mxu0 0.0
    %255 = vmatpush1.msra.mxu0 0.0
    %256 = vmatprep.subr.mxu0 0.0
    %257 = vmatpush1.msra.mxu0 0.0
    %258 = vmatprep.mubr.f32.mxu0 0.0
    %259 = vmatmul.mubr.f32.gmra.mrb[0].mxu0 %v192
    %v260 = vpop.f32.mrb[0].mxu0
    %v261 = vadd.f32 0.0, %v260
    %v262 = vpop.f32.mrb[0].mxu0
    %263 = vdwg.mxu0
    %v264 = vmul.f32 %v261, 0.015625
    %v265 = vlaneseq
    %v266 = vshrl.u32 %v265, 7
    %v267 = vsub.s32 0, %v266
    %v268 = vrot.slane %v264, %v267
    %v269 = vsub.f32 %v152, %v268
    %v270 = vsub.f32 %v157, %v268
    %v271 = vsub.f32 %v162, %v268
    %v272 = vsub.f32 %v167, %v268
    %v273 = vsub.f32 %v172, %v268
    %v274 = vsub.f32 %v177, %v268
    %v275 = vsub.f32 %v182, %v268
    %v276 = vsub.f32 %v187, %v268
    %v277 = vmul.f32 %v269, %v269
    %v278 = vmul.f32 %v270, %v270
    %v279 = vmul.f32 %v271, %v271
    %v280 = vmul.f32 %v272, %v272
    %v281 = vmul.f32 %v273, %v273
    %v282 = vmul.f32 %v274, %v274
    %v283 = vmul.f32 %v275, %v275
    %v284 = vmul.f32 %v276, %v276
    %285 = vmatprep.subr.mxu0 0.0
    %286 = vmatpush1.msra.mxu0 %v277
    %287 = vmatprep.subr.mxu0 0.0
    %288 = vmatpush1.msra.mxu0 %v278
    %289 = vmatprep.subr.mxu0 0.0
    %290 = vmatpush1.msra.mxu0 %v279
    %291 = vmatprep.subr.mxu0 0.0
    %292 = vmatpush1.msra.mxu0 %v280
    %293 = vmatprep.subr.mxu0 0.0
    %294 = vmatpush1.msra.mxu0 %v281
    %295 = vmatprep.subr.mxu0 0.0
    %296 = vmatpush1.msra.mxu0 %v282
    %297 = vmatprep.subr.mxu0 0.0
    %298 = vmatpush1.msra.mxu0 %v283
    %299 = vmatprep.subr.mxu0 0.0
    %300 = vmatpush1.msra.mxu0 %v284
    %301 = vmatprep.subr.mxu0 0.0
    %302 = vmatpush1.msra.mxu0 0.0
    %303 = vmatprep.subr.mxu0 0.0
    %304 = vmatpush1.msra.mxu0 0.0
    %305 = vmatprep.subr.mxu0 0.0
    %306 = vmatpush1.msra.mxu0 0.0
    %307 = vmatprep.subr.mxu0 0.0
    %308 = vmatpush1.msra.mxu0 0.0
    %309 = vmatprep.subr.mxu0 0.0
    %310 = vmatpush1.msra.mxu0 0.0
    %311 = vmatprep.subr.mxu0 0.0
    %312 = vmatpush1.msra.mxu0 0.0
    %313 = vmatprep.subr.mxu0 0.0
    %314 = vmatpush1.msra.mxu0 0.0
    %315 = vmatprep.subr.mxu0 0.0
    %316 = vmatpush1.msra.mxu0 0.0
    %317 = vmatprep.subr.mxu0 0.0
    %318 = vmatpush1.msra.mxu0 0.0
    %319 = vmatprep.subr.mxu0 0.0
    %320 = vmatpush1.msra.mxu0 0.0
    %321 = vmatprep.subr.mxu0 0.0
    %322 = vmatpush1.msra.mxu0 0.0
    %323 = vmatprep.subr.mxu0 0.0
    %324 = vmatpush1.msra.mxu0 0.0
    %325 = vmatprep.subr.mxu0 0.0
    %326 = vmatpush1.msra.mxu0 0.0
    %327 = vmatprep.subr.mxu0 0.0
    %328 = vmatpush1.msra.mxu0 0.0
    %329 = vmatprep.subr.mxu0 0.0
    %330 = vmatpush1.msra.mxu0 0.0
    %331 = vmatprep.subr.mxu0 0.0
    %332 = vmatpush1.msra.mxu0 0.0
    %333 = vmatprep.subr.mxu0 0.0
    %334 = vmatpush1.msra.mxu0 0.0
    %335 = vmatprep.subr.mxu0 0.0
    %336 = vmatpush1.msra.mxu0 0.0
    %337 = vmatprep.subr.mxu0 0.0
    %338 = vmatpush1.msra.mxu0 0.0
    %339 = vmatprep.subr.mxu0 0.0
    %340 = vmatpush1.msra.mxu0 0.0
    %341 = vmatprep.subr.mxu0 0.0
    %342 = vmatpush1.msra.mxu0 0.0
    %343 = vmatprep.subr.mxu0 0.0
    %344 = vmatpush1.msra.mxu0 0.0
    %345 = vmatprep.subr.mxu0 0.0
    %346 = vmatpush1.msra.mxu0 0.0
    %347 = vmatprep.subr.mxu0 0.0
    %348 = vmatpush1.msra.mxu0 0.0
    %349 = vmatprep.mubr.f32.mxu0 0.0
    %350 = vmatmul.mubr.f32.gmra.mrb[0].mxu0 %v192
    %v351 = vpop.f32.mrb[0].mxu0
    %v352 = vadd.f32 0.0, %v351
    %v353 = vpop.f32.mrb[0].mxu0
    %354 = vdwg.mxu0
    %v355 = vmul.f32 %v352, 0.015625
    %v356 = vadd.f32 %v355, 1e-05
    %v357 = vrsqrt.pop %v356
    %v358 = vmul.f32 %v45, %v357
    %v359 = vlaneseq
    %v360 = vshrl.u32 %v359, 7
    %v361 = vsub.s32 0, %v360
    %v362 = vrot.slane %v358, %v361
    %v363 = vmul.f32 %v269, %v362
    %v364 = vmul.f32 %v270, %v362
    %v365 = vmul.f32 %v271, %v362
    %v366 = vmul.f32 %v272, %v362
    %v367 = vmul.f32 %v273, %v362
    %v368 = vmul.f32 %v274, %v362
    %v369 = vmul.f32 %v275, %v362
    %v370 = vmul.f32 %v276, %v362
    %v371 = vlaneseq
    %v372 = vshrl.u32 %v371, 7
    %v373 = vsub.s32 0, %v372
    %v374 = vrot.slane %v46, %v373
    %v375 = vadd.f32 %v363, %v374
    %v376 = vadd.f32 %v364, %v374
    %v377 = vadd.f32 %v365, %v374
    %v378 = vadd.f32 %v366, %v374
    %v379 = vadd.f32 %v367, %v374
    %v380 = vadd.f32 %v368, %v374
    %v381 = vadd.f32 %v369, %v374
    %v382 = vadd.f32 %v370, %v374
    %v383 = vtanh.pop %v375
    %v384 = vtanh.pop %v376
    %v385 = vtanh.pop %v377
    %v386 = vtanh.pop %v378
    %v387 = vtanh.pop %v379
    %v388 = vtanh.pop %v380
    %v389 = vtanh.pop %v381
    %v390 = vtanh.pop %v382
    %391 = vmatprep.subr.mxu0 0.0
    %392 = vmatpush1.msra.mxu0 %v29
    %393 = vmatprep.subr.mxu0 0.0
    %394 = vmatpush1.msra.mxu0 %v30
    %395 = vmatprep.subr.mxu0 0.0
    %396 = vmatpush1.msra.mxu0 %v31
    %397 = vmatprep.subr.mxu0 0.0
    %398 = vmatpush1.msra.mxu0 %v32
    %399 = vmatprep.subr.mxu0 0.0
    %400 = vmatpush1.msra.mxu0 %v33
    %401 = vmatprep.subr.mxu0 0.0
    %402 = vmatpush1.msra.mxu0 %v34
    %403 = vmatprep.subr.mxu0 0.0
    %404 = vmatpush1.msra.mxu0 %v35
    %405 = vmatprep.subr.mxu0 0.0
    %406 = vmatpush1.msra.mxu0 %v36
    %407 = vmatprep.subr.mxu0 0.0
    %408 = vmatpush1.msra.mxu0 %v37
    %409 = vmatprep.subr.mxu0 0.0
    %410 = vmatpush1.msra.mxu0 %v38
    %411 = vmatprep.subr.mxu0 0.0
    %412 = vmatpush1.msra.mxu0 %v39
    %413 = vmatprep.subr.mxu0 0.0
    %414 = vmatpush1.msra.mxu0 %v40
    %415 = vmatprep.subr.mxu0 0.0
    %416 = vmatpush1.msra.mxu0 %v41
    %417 = vmatprep.subr.mxu0 0.0
    %418 = vmatpush1.msra.mxu0 %v42
    %419 = vmatprep.subr.mxu0 0.0
    %420 = vmatpush1.msra.mxu0 %v43
    %421 = vmatprep.subr.mxu0 0.0
    %422 = vmatpush1.msra.mxu0 %v44
    %423 = vmatprep.subr.mxu0 0.0
    %424 = vmatpush1.msra.mxu0 0.0
    %425 = vmatprep.subr.mxu0 0.0
    %426 = vmatpush1.msra.mxu0 0.0
    %427 = vmatprep.subr.mxu0 0.0
    %428 = vmatpush1.msra.mxu0 0.0
    %429 = vmatprep.subr.mxu0 0.0
    %430 = vmatpush1.msra.mxu0 0.0
    %431 = vmatprep.subr.mxu0 0.0
    %432 = vmatpush1.msra.mxu0 0.0
    %433 = vmatprep.subr.mxu0 0.0
    %434 = vmatpush1.msra.mxu0 0.0
    %435 = vmatprep.subr.mxu0 0.0
    %436 = vmatpush1.msra.mxu0 0.0
    %437 = vmatprep.subr.mxu0 0.0
    %438 = vmatpush1.msra.mxu0 0.0
    %439 = vmatprep.subr.mxu0 0.0
    %440 = vmatpush1.msra.mxu0 0.0
    %441 = vmatprep.subr.mxu0 0.0
    %442 = vmatpush1.msra.mxu0 0.0
    %443 = vmatprep.subr.mxu0 0.0
    %444 = vmatpush1.msra.mxu0 0.0
    %445 = vmatprep.subr.mxu0 0.0
    %446 = vmatpush1.msra.mxu0 0.0
    %447 = vmatprep.subr.mxu0 0.0
    %448 = vmatpush1.msra.mxu0 0.0
    %449 = vmatprep.subr.mxu0 0.0
    %450 = vmatpush1.msra.mxu0 0.0
    %451 = vmatprep.subr.mxu0 0.0
    %452 = vmatpush1.msra.mxu0 0.0
    %453 = vmatprep.subr.mxu0 0.0
    %454 = vmatpush1.msra.mxu0 0.0
    %455 = vmatprep.mubr.f32.mxu0 0.0
    %456 = vmatmul.mubr.f32.gmra.mrb[0].mxu0 %v383
    %v457 = vpop.f32.mrb[0].mxu0
    %v458 = vadd.f32 0.0, %v457
    %v459 = vpop.f32.mrb[0].mxu0
    %460 = vmatprep.mubr.f32.mxu0 0.0
    %461 = vmatmul.mubr.f32.gmra.mrb[0].mxu0 %v384
    %v462 = vpop.f32.mrb[0].mxu0
    %v463 = vadd.f32 0.0, %v462
    %v464 = vpop.f32.mrb[0].mxu0
    %465 = vmatprep.mubr.f32.mxu0 0.0
    %466 = vmatmul.mubr.f32.gmra.mrb[0].mxu0 %v385
    %v467 = vpop.f32.mrb[0].mxu0
    %v468 = vadd.f32 0.0, %v467
    %v469 = vpop.f32.mrb[0].mxu0
    %470 = vmatprep.mubr.f32.mxu0 0.0
    %471 = vmatmul.mubr.f32.gmra.mrb[0].mxu0 %v386
    %v472 = vpop.f32.mrb[0].mxu0
    %v473 = vadd.f32 0.0, %v472
    %v474 = vpop.f32.mrb[0].mxu0
    %475 = vmatprep.mubr.f32.mxu0 0.0
    %476 = vmatmul.mubr.f32.gmra.mrb[0].mxu0 %v387
    %v477 = vpop.f32.mrb[0].mxu0
    %v478 = vadd.f32 0.0, %v477
    %v479 = vpop.f32.mrb[0].mxu0
    %480 = vmatprep.mubr.f32.mxu0 0.0
    %481 = vmatmul.mubr.f32.gmra.mrb[0].mxu0 %v388
    %v482 = vpop.f32.mrb[0].mxu0
    %v483 = vadd.f32 0.0, %v482
    %v484 = vpop.f32.mrb[0].mxu0
    %485 = vmatprep.mubr.f32.mxu0 0.0
    %486 = vmatmul.mubr.f32.gmra.mrb[0].mxu0 %v389
    %v487 = vpop.f32.mrb[0].mxu0
    %v488 = vadd.f32 0.0, %v487
    %v489 = vpop.f32.mrb[0].mxu0
    %490 = vmatprep.mubr.f32.mxu0 0.0
    %491 = vmatmul.mubr.f32.gmra.mrb[0].mxu0 %v390
    %v492 = vpop.f32.mrb[0].mxu0
    %v493 = vadd.f32 0.0, %v492
    %v494 = vpop.f32.mrb[0].mxu0
    %495 = vdwg.mxu0
    %v496 = vlaneseq
    %v497 = vshrl.u32 %v496, 7
    %v498 = vsub.s32 0, %v497
    %v499 = vrot.slane %v47, %v498
    %v500 = vadd.f32 %v458, %v499
    %v501 = vadd.f32 %v463, %v499
    %v502 = vadd.f32 %v468, %v499
    %v503 = vadd.f32 %v473, %v499
    %v504 = vadd.f32 %v478, %v499
    %v505 = vadd.f32 %v483, %v499
    %v506 = vadd.f32 %v488, %v499
    %v507 = vadd.f32 %v493, %v499
    %v508 = vtanh.pop %v500
    %v509 = vtanh.pop %v501
    %v510 = vtanh.pop %v502
    %v511 = vtanh.pop %v503
    %v512 = vtanh.pop %v504
    %v513 = vtanh.pop %v505
    %v514 = vtanh.pop %v506
    %v515 = vtanh.pop %v507
    %vm516 = vcmask 15360
    %517 = vst.msk [vmem:[%s2] sm:$0xff] %vm516, %v508
    %518 = vst.msk [vmem:[%s2 + $0x8] sm:$0xff] %vm516, %v509
    %519 = vst.msk [vmem:[%s2 + $0x10] sm:$0xff] %vm516, %v510
    %520 = vst.msk [vmem:[%s2 + $0x18] sm:$0xff] %vm516, %v511
    %521 = vst.msk [vmem:[%s2 + $0x20] sm:$0xff] %vm516, %v512
    %522 = vst.msk [vmem:[%s2 + $0x28] sm:$0xff] %vm516, %v513
    %523 = vst.msk [vmem:[%s2 + $0x30] sm:$0xff] %vm516, %v514
    %524 = vst.msk [vmem:[%s2 + $0x38] sm:$0xff] %vm516, %v515
    // Predicated region
    $region14: #{fwd.1} parent=1 // pred_check
      _
    $region15: #{fwd.1} parent=1 // pred_check_branch
      %526 = sbr.rel (0) target = $region17
    $region16: #{fwd.1} parent=1 // pred_region
      _
    $region17: #{fwd.1} parent=1 // pred_fallthru
      _
    // Predicated region
    $region18: #{fwd.1} parent=1 // pred_check
      _
    $region19: #{fwd.1} parent=1 // pred_check_branch
      %528 = sbr.rel (0) target = $region21
    $region20: #{fwd.1} parent=1 // pred_region
      _
    $region21: #{fwd.1} parent=1 // pred_fallthru
      _
    %529 = vsyncpa [#allocation3], 1

</llo_original>
